<compile_context>
chip_gen: v6e
topology: v6e:2x2x1
jax: 0.10.0
libtpu: 0.0.40
codegen_flags: <defaults>
</compile_context>

<pallas_src>
import functools

import jax
import jax.numpy as jnp
from jax import lax
from jax.experimental import pallas as pl
from jax.experimental.pallas import tpu as pltpu


def _round_up(x: int, m: int) -> int:
    return ((x + m - 1) // m) * m


def _infonce_kernel(xi_ref, xj_ref, k_ref, out_ref, m_ref, s_ref,
                    *, temperature: float, batch: int, tm: int, tn: int):
    i = pl.program_id(0)          # row block over xi
    j = pl.program_id(1)          # column block over stacked keys K
    nj = pl.num_programs(1)

    # Init running max / sum for this row block (j is the innermost grid axis).
    @pl.when(j == 0)
    def _():
        m_ref[...] = jnp.full_like(m_ref, -1e30)   # finite: avoids inf-inf NaN
        s_ref[...] = jnp.zeros_like(s_ref)

    xi = xi_ref[...]              # (TM, D), native dtype -> MXU fast path
    kk = k_ref[...]               # (TN, D)
    inv_t = jnp.float32(1.0 / temperature)

    # (TM, D) x (TN, D) contracting D-vs-D -> (TM, TN); no transpose materialized.
    logits = lax.dot_general(
        xi, kk,
        dimension_numbers=(((1,), (1,)), ((), ())),
        preferred_element_type=jnp.float32,
    ) * inv_t

    # Per-tile mask from global offsets:
    #   cols [0, B)      : sim_ij  -> unmasked
    #   cols [B, 2B)     : sim_ii  -> mask its diagonal (col == row + B)
    #   cols [2B, K_pad) : padding -> mask
    row_g = i * tm + lax.broadcasted_iota(jnp.int32, (tm, tn), 0)
    col_g = j * tn + lax.broadcasted_iota(jnp.int32, (tm, tn), 1)
    mask = ((col_g >= batch) & (col_g == row_g + batch)) | (col_g >= 2 * batch)
    logits = jnp.where(mask, -jnp.inf, logits)

    # Online logsumexp update.
    m_old = m_ref[...]                                            # (TM, 1)
    m_new = jnp.maximum(m_old, jnp.max(logits, axis=-1, keepdims=True))
    alpha = jnp.exp(m_old - m_new)
    s_ref[...] = alpha * s_ref[...] + jnp.sum(jnp.exp(logits - m_new),
                                              axis=-1, keepdims=True)
    m_ref[...] = m_new

    # Finalize: per-row loss term = logsumexp - target logit.
    @pl.when(j == nj - 1)
    def _():
        tgt = jnp.sum(xi.astype(jnp.float32) * xj_ref[...].astype(jnp.float32),
                      axis=-1, keepdims=True) * inv_t              # (TM, 1)
        out_ref[...] = m_ref[...] + jnp.log(s_ref[...]) - tgt


def infonce_loss(rep_i: jax.Array, rep_j: jax.Array, temperature: float = 1.0,
                 *, tm_target: int = 256, tn_target: int = 512) -> jax.Array:
    """InfoNCE loss (batch_both / inner_product / no instance labels)."""
    assert rep_i.shape == rep_j.shape and rep_i.ndim == 2
    B, D = rep_i.shape

    TM = min(tm_target, _round_up(B, 8))
    B_pad = _round_up(B, TM)
    TN = min(tn_target, _round_up(2 * B, 8))
    K_rows = _round_up(2 * B, TN)

    xi = rep_i if B_pad == B else jnp.pad(rep_i, ((0, B_pad - B), (0, 0)))
    xj = rep_j if B_pad == B else jnp.pad(rep_j, ((0, B_pad - B), (0, 0)))
    keys = jnp.concatenate([rep_j, rep_i], axis=0)                 # (2B, D)
    if K_rows != 2 * B:
        keys = jnp.pad(keys, ((0, K_rows - 2 * B), (0, 0)))

    grid = (B_pad // TM, K_rows // TN)
    kernel = functools.partial(_infonce_kernel, temperature=float(temperature),
                               batch=B, tm=TM, tn=TN)

    per_row = pl.pallas_call(
        kernel,
        out_shape=jax.ShapeDtypeStruct((B_pad, 1), jnp.float32),
        grid_spec=pltpu.PrefetchScalarGridSpec(
            num_scalar_prefetch=0,
            grid=grid,
            in_specs=[
                pl.BlockSpec((TM, D), lambda i, j: (i, 0)),   # xi row block
                pl.BlockSpec((TM, D), lambda i, j: (i, 0)),   # xj row block
                pl.BlockSpec((TN, D), lambda i, j: (j, 0)),   # stacked keys block
            ],
            out_specs=pl.BlockSpec((TM, 1), lambda i, j: (i, 0)),
            scratch_shapes=[pltpu.VMEM((TM, 1), jnp.float32),   # running max
                            pltpu.VMEM((TM, 1), jnp.float32)],  # running sum
        ),
        compiler_params=pltpu.CompilerParams(
            dimension_semantics=("parallel", "arbitrary")),
    )(xi, xj, keys)

    return jnp.sum(per_row[:B, 0]) / jnp.float32(B)


def _infonce_loss_ref(rep_i, rep_j, temperature=1.0):
    """Pure-JAX reference mirroring the PyTorch forward (batch_both, inner_product)."""
    B = rep_i.shape[0]
    ri = rep_i.astype(jnp.float32)
    rj = rep_j.astype(jnp.float32)
    sim_ii = (ri @ ri.T) / temperature
    sim_ij = (ri @ rj.T) / temperature
    sim_ii = jnp.where(jnp.eye(B, dtype=bool), -jnp.inf, sim_ii)
    logits = jnp.concatenate([sim_ij, sim_ii], axis=-1)
    lse = jax.nn.logsumexp(logits, axis=-1)
    target = sim_ij[jnp.arange(B), jnp.arange(B)]
    return jnp.mean(lse - target)


if __name__ == "__main__":
    key = jax.random.PRNGKey(0)
    k1, k2, k3, k4 = jax.random.split(key, 4)

    # Case 1: small aligned shapes (batch=8, hidden=32), temperature=1.0.
    B, D = 8, 32
    rep_i = jax.random.normal(k1, (B, D), dtype=jnp.float32)
    rep_j = jax.random.normal(k2, (B, D), dtype=jnp.float32)
    loss = jax.block_until_ready(infonce_loss(rep_i, rep_j, temperature=1.0))
    ref = jax.block_until_ready(_infonce_loss_ref(rep_i, rep_j, temperature=1.0))
    assert jnp.isfinite(loss), "loss is not finite"
    assert jnp.allclose(loss, ref, atol=1e-4, rtol=1e-4), (loss, ref)

    # Case 2: unaligned batch (exercises row/column padding masks), temperature=0.5.
    B2, D2 = 10, 32
    rep_i2 = jax.random.normal(k3, (B2, D2), dtype=jnp.float32)
    rep_j2 = jax.random.normal(k4, (B2, D2), dtype=jnp.float32)
    loss2 = jax.block_until_ready(infonce_loss(rep_i2, rep_j2, temperature=0.5))
    ref2 = jax.block_until_ready(_infonce_loss_ref(rep_i2, rep_j2, temperature=0.5))
    assert jnp.isfinite(loss2), "loss2 is not finite"
    assert jnp.allclose(loss2, ref2, atol=1e-4, rtol=1e-4), (loss2, ref2)

    print("KERNEL_OK")
</pallas_src>

<mosaic_0001>
module attributes {stable_mosaic.version = 11 : i64} {
  func.func @_infonce_kernel(%arg0: i32, %arg1: i32, %arg2: memref<8x32xf32, #tpu.memory_space<vmem>>, %arg3: memref<8x32xf32, #tpu.memory_space<vmem>>, %arg4: memref<16x32xf32, #tpu.memory_space<vmem>>, %arg5: memref<8x1xf32, #tpu.memory_space<vmem>>, %arg6: memref<8x1xf32, #tpu.memory_space<vmem>>, %arg7: memref<8x1xf32, #tpu.memory_space<vmem>>) attributes {dimension_semantics = [#tpu.dimension_semantics<parallel>, #tpu.dimension_semantics<arbitrary>], iteration_bounds = array<i64: 1, 1>, scalar_prefetch = 0 : i64, scratch_operands = 2 : i64, tpu.core_type = #tpu.core_type<tc>, window_params = [{transform_indices = @transform_0, window_bounds = array<i64: 8, 32>}, {transform_indices = @transform_1, window_bounds = array<i64: 8, 32>}, {transform_indices = @transform_2, window_bounds = array<i64: 16, 32>}, {transform_indices = @transform_3, window_bounds = array<i64: 8, 1>}]} {
    %c0_i32 = arith.constant 0 : i32
    %0 = arith.cmpi eq, %arg1, %c0_i32 : i32
    %1 = arith.extui %0 : i1 to i32
    %c0_i32_0 = arith.constant 0 : i32
    %2 = arith.cmpi ne, %1, %c0_i32_0 : i32
    scf.if %2 {
      %cst_22 = arith.constant -1.000000e+30 : f32
      %46 = vector.broadcast %cst_22 : f32 to vector<8x1xf32>
      %c0_23 = arith.constant 0 : index
      %c0_24 = arith.constant 0 : index
      %47 = vector.load %arg6[%c0_23, %c0_24] : memref<8x1xf32, #tpu.memory_space<vmem>>, vector<8x1xf32>
      tpu.vector_store %arg6[%c0_23, %c0_24], %46 {strides = array<i32>} : memref<8x1xf32, #tpu.memory_space<vmem>>, vector<8x1xf32>,
      %cst_25 = arith.constant 0.000000e+00 : f32
      %48 = vector.broadcast %cst_25 : f32 to vector<8x1xf32>
      %c0_26 = arith.constant 0 : index
      %c0_27 = arith.constant 0 : index
      %49 = vector.load %arg7[%c0_26, %c0_27] : memref<8x1xf32, #tpu.memory_space<vmem>>, vector<8x1xf32>
      tpu.vector_store %arg7[%c0_26, %c0_27], %48 {strides = array<i32>} : memref<8x1xf32, #tpu.memory_space<vmem>>, vector<8x1xf32>,
    } else {
    }
    %c0 = arith.constant 0 : index
    %c0_1 = arith.constant 0 : index
    %3 = vector.load %arg2[%c0, %c0_1] : memref<8x32xf32, #tpu.memory_space<vmem>>, vector<8x32xf32>
    %c0_2 = arith.constant 0 : index
    %c0_3 = arith.constant 0 : index
    %4 = vector.load %arg4[%c0_2, %c0_3] : memref<16x32xf32, #tpu.memory_space<vmem>>, vector<16x32xf32>
    %cst = arith.constant dense<0.000000e+00> : vector<8x16xf32>
    %5 = tpu.matmul %3, %4, %cst {dimension_numbers = #tpu.dot_dimension_numbers<[1], [1], [0], [0], [0, 0, 1, 0], [], []>} : vector<8x32xf32>, vector<16x32xf32>, vector<8x16xf32> -> vector<8x16xf32>
    %cst_4 = arith.constant 1.000000e+00 : f32
    %6 = vector.broadcast %cst_4 : f32 to vector<8x16xf32>
    %7 = arith.mulf %5, %6 : vector<8x16xf32>
    %c8_i32 = arith.constant 8 : i32
    %8 = arith.muli %arg0, %c8_i32 : i32
    %9 = tpu.iota {dimensions = array<i32: 0>} : vector<8x16xi32>
    %10 = vector.broadcast %8 : i32 to vector<8x16xi32>
    %11 = arith.addi %10, %9 : vector<8x16xi32>
    %c16_i32 = arith.constant 16 : i32
    %12 = arith.muli %arg1, %c16_i32 : i32
    %13 = tpu.iota {dimensions = array<i32: 1>} : vector<8x16xi32>
    %14 = vector.broadcast %12 : i32 to vector<8x16xi32>
    %15 = arith.addi %14, %13 : vector<8x16xi32>
    %c8_i32_5 = arith.constant 8 : i32
    %16 = vector.broadcast %c8_i32_5 : i32 to vector<8x16xi32>
    %17 = arith.cmpi sge, %15, %16 : vector<8x16xi32>
    %c8_i32_6 = arith.constant 8 : i32
    %18 = vector.broadcast %c8_i32_6 : i32 to vector<8x16xi32>
    %19 = arith.addi %11, %18 : vector<8x16xi32>
    %20 = arith.cmpi eq, %15, %19 : vector<8x16xi32>
    %21 = arith.andi %17, %20 : vector<8x16xi1>
    %c16_i32_7 = arith.constant 16 : i32
    %22 = vector.broadcast %c16_i32_7 : i32 to vector<8x16xi32>
    %23 = arith.cmpi sge, %15, %22 : vector<8x16xi32>
    %24 = arith.ori %21, %23 : vector<8x16xi1>
    %cst_8 = arith.constant 0xFF800000 : f32
    %25 = vector.broadcast %cst_8 : f32 to vector<8x16xf32>
    %26 = arith.select %24, %25, %7 : vector<8x16xi1>, vector<8x16xf32>
    %c0_9 = arith.constant 0 : index
    %c0_10 = arith.constant 0 : index
    %27 = vector.load %arg6[%c0_9, %c0_10] : memref<8x1xf32, #tpu.memory_space<vmem>>, vector<8x1xf32>
    %cst_11 = arith.constant dense<0xFF800000> : vector<8xf32>
    %28 = vector.multi_reduction <maximumf>, %26, %cst_11 [1] : vector<8x16xf32> to vector<8xf32>
    %29 = vector.shape_cast %28 : vector<8xf32> to vector<8x1xf32>
    %30 = arith.maximumf %27, %29 : vector<8x1xf32>
    %31 = arith.subf %27, %30 : vector<8x1xf32>
    %32 = math.exp %31 : vector<8x1xf32>
    %c0_12 = arith.constant 0 : index
    %c0_13 = arith.constant 0 : index
    %33 = vector.load %arg7[%c0_12, %c0_13] : memref<8x1xf32, #tpu.memory_space<vmem>>, vector<8x1xf32>
    %34 = arith.mulf %32, %33 : vector<8x1xf32>
    %35 = vector.broadcast %30 : vector<8x1xf32> to vector<8x16xf32>
    %36 = arith.subf %26, %35 : vector<8x16xf32>
    %37 = math.exp %36 : vector<8x16xf32>
    %cst_14 = arith.constant dense<0.000000e+00> : vector<8xf32>
    %38 = vector.multi_reduction <add>, %37, %cst_14 [1] : vector<8x16xf32> to vector<8xf32>
    %39 = vector.shape_cast %38 : vector<8xf32> to vector<8x1xf32>
    %40 = arith.addf %34, %39 : vector<8x1xf32>
    %c0_15 = arith.constant 0 : index
    %c0_16 = arith.constant 0 : index
    %41 = vector.load %arg7[%c0_15, %c0_16] : memref<8x1xf32, #tpu.memory_space<vmem>>, vector<8x1xf32>
    tpu.vector_store %arg7[%c0_15, %c0_16], %40 {strides = array<i32>} : memref<8x1xf32, #tpu.memory_space<vmem>>, vector<8x1xf32>,
    %c0_17 = arith.constant 0 : index
    %c0_18 = arith.constant 0 : index
    %42 = vector.load %arg6[%c0_17, %c0_18] : memref<8x1xf32, #tpu.memory_space<vmem>>, vector<8x1xf32>
    tpu.vector_store %arg6[%c0_17, %c0_18], %30 {strides = array<i32>} : memref<8x1xf32, #tpu.memory_space<vmem>>, vector<8x1xf32>,
    %c0_i32_19 = arith.constant 0 : i32
    %43 = arith.cmpi eq, %arg1, %c0_i32_19 : i32
    %44 = arith.extui %43 : i1 to i32
    %cst_20 = arith.constant 1.000000e+00 : f32
    %c0_i32_21 = arith.constant 0 : i32
    %45 = arith.cmpi ne, %44, %c0_i32_21 : i32
    scf.if %45 {
      %c0_22 = arith.constant 0 : index
      %c0_23 = arith.constant 0 : index
      %46 = vector.load %arg3[%c0_22, %c0_23] : memref<8x32xf32, #tpu.memory_space<vmem>>, vector<8x32xf32>
      %47 = arith.mulf %3, %46 : vector<8x32xf32>
      %cst_24 = arith.constant dense<0.000000e+00> : vector<8xf32>
      %48 = vector.multi_reduction <add>, %47, %cst_24 [1] : vector<8x32xf32> to vector<8xf32>
      %49 = vector.shape_cast %48 : vector<8xf32> to vector<8x1xf32>
      %50 = vector.broadcast %cst_20 : f32 to vector<8x1xf32>
      %51 = arith.mulf %49, %50 : vector<8x1xf32>
      %c0_25 = arith.constant 0 : index
      %c0_26 = arith.constant 0 : index
      %52 = vector.load %arg6[%c0_25, %c0_26] : memref<8x1xf32, #tpu.memory_space<vmem>>, vector<8x1xf32>
      %c0_27 = arith.constant 0 : index
      %c0_28 = arith.constant 0 : index
      %53 = vector.load %arg7[%c0_27, %c0_28] : memref<8x1xf32, #tpu.memory_space<vmem>>, vector<8x1xf32>
      %54 = math.log %53 : vector<8x1xf32>
      %55 = arith.addf %52, %54 : vector<8x1xf32>
      %56 = arith.subf %55, %51 : vector<8x1xf32>
      %c0_29 = arith.constant 0 : index
      %c0_30 = arith.constant 0 : index
      %57 = vector.load %arg5[%c0_29, %c0_30] : memref<8x1xf32, #tpu.memory_space<vmem>>, vector<8x1xf32>
      tpu.vector_store %arg5[%c0_29, %c0_30], %56 {strides = array<i32>} : memref<8x1xf32, #tpu.memory_space<vmem>>, vector<8x1xf32>,
    } else {
    }
    return
  }
  func.func @transform_0(%arg0: i32, %arg1: i32) -> (i32, i32) {
    %c0_i32 = arith.constant 0 : i32
    %c0_i32_0 = arith.constant 0 : i32
    return %arg0, %c0_i32 : i32, i32
  }
  func.func @transform_1(%arg0: i32, %arg1: i32) -> (i32, i32) {
    %c0_i32 = arith.constant 0 : i32
    %c0_i32_0 = arith.constant 0 : i32
    return %arg0, %c0_i32 : i32, i32
  }
  func.func @transform_2(%arg0: i32, %arg1: i32) -> (i32, i32) {
    %c0_i32 = arith.constant 0 : i32
    %c0_i32_0 = arith.constant 0 : i32
    return %arg1, %c0_i32 : i32, i32
  }
  func.func @transform_3(%arg0: i32, %arg1: i32) -> (i32, i32) {
    %c0_i32 = arith.constant 0 : i32
    %c0_i32_0 = arith.constant 0 : i32
    return %arg0, %c0_i32 : i32, i32
  }
}

</mosaic_0001>

<llo_original>
// kernel: tpu_custom_call.1
$region0: #{tpu_custom_call.1}
  #allocation0 [shape = 'u32[]', space=smem, size = 0x4, offset = 0x4, fixed_abs, tag = 'smem constant byte address 0x4 - core index']
  #allocation1 [shape = 'u32[144,128]{1,0:T(1,128)}', space=vmem, size = 0x12000, scoped, tag = 'internal scratch']
  #allocation2 [shape = 'f32[8,1]{1,0:T(8,128)}', space=vmem, size = 0x1000, scoped, tag = 'scratch operand']
  #allocation3 [shape = 'f32[8,1]{1,0:T(8,128)}', space=vmem, size = 0x1000, scoped, tag = 'scratch operand']
  %s0 = inlined_call_operand.hbm [shape: f32[8,32], index: 0, kind: input, shape index: {}]
  %s1 = inlined_call_operand.hbm [shape: f32[8,32], index: 1, kind: input, shape index: {}]
  %s2 = inlined_call_operand.hbm [shape: f32[16,32], index: 2, kind: input, shape index: {}]
  %s3 = inlined_call_operand.vmem [shape: f32[8,1], index: 3, kind: output, shape index: {}]
  %s4 = sld [smem:[#allocation0]]
  $region42: #{tpu_custom_call.1} parent=0
    _
  %s6 = ssub.s32 1, %s4
  %s7 = scalar_select 0, %s6, %s4
  $region1: #{tpu_custom_call.1} parent=0
    #allocation4 [shape = 'u8[4096]{0}', space=vmem, size = 0x1000, scoped, tag = 'input window, operand 0, single buffered']
    #allocation5 [shape = 's32[1]{0}', space=sflag, size = 0x4, scoped, tag = 'scoped memory for tpu_custom_call.1']
    #allocation6 [shape = 'u8[4096]{0}', space=vmem, size = 0x1000, scoped, tag = 'input window, operand 1, single buffered']
    #allocation7 [shape = 's32[1]{0}', space=sflag, size = 0x4, scoped, tag = 'scoped memory for tpu_custom_call.1']
    #allocation8 [shape = 'u8[8192]{0}', space=vmem, size = 0x2000, scoped, tag = 'input window, operand 2, single buffered']
    %8 = vsyncpa [#allocation5], 0
    %9 = vsyncpa [#allocation7], 0
    // Predicated region
    $region2: #{tpu_custom_call.1} parent=1 // pred_check
      _
    $region3: #{tpu_custom_call.1} parent=1 // pred_check_branch
      %11 = sbr.rel (0) target = $region5
    $region4: #{tpu_custom_call.1} parent=1 // pred_region
      %s13 = ssub.s32 128, 128
      %14 = vsyncadd [#allocation5], %s13
      %s16 = sshll.u32 [#allocation4], 4
      %s17 = int_to_ptr.vmem [resolvable:$true] %s16
      %19 = dma.hbm_to_vmem [thread:$0]  %s0, 128, %s17, [#allocation5]
    $region5: #{tpu_custom_call.1} parent=1 // pred_fallthru
      _
    // Predicated region
    $region6: #{tpu_custom_call.1} parent=1 // pred_check
      _
    $region7: #{tpu_custom_call.1} parent=1 // pred_check_branch
      %21 = sbr.rel (0) target = $region9
    $region8: #{tpu_custom_call.1} parent=1 // pred_region
      %s23 = ssub.s32 128, 128
      %24 = vsyncadd [#allocation7], %s23
      %s26 = sshll.u32 [#allocation6], 4
      %s27 = int_to_ptr.vmem [resolvable:$true] %s26
      %29 = dma.hbm_to_vmem [thread:$0]  %s1, 128, %s27, [#allocation7]
    $region9: #{tpu_custom_call.1} parent=1 // pred_fallthru
      _
    // Predicated region
    $region10: #{tpu_custom_call.1} parent=1 // pred_check
      _
    $region11: #{tpu_custom_call.1} parent=1 // pred_check_branch
      %31 = sbr.rel (0) target = $region13
    $region12: #{tpu_custom_call.1} parent=1 // pred_region
      %s33 = ssub.s32 256, 256
      %34 = vsyncadd [#allocation7], %s33
      %s35 = sshll.u32 [#allocation8], 4
      %s36 = int_to_ptr.vmem [resolvable:$true] %s35
      %41 = dma.hbm_to_vmem [thread:$0]  %s2, 256, %s36, [#allocation7], 128, 128, 8
    $region13: #{tpu_custom_call.1} parent=1 // pred_fallthru
      _
    // Predicated region
    $region14: #{tpu_custom_call.1} parent=1 // pred_check
      _
    $region15: #{tpu_custom_call.1} parent=1 // pred_check_branch
      %43 = sbr.rel (0) target = $region17
    $region16: #{tpu_custom_call.1} parent=1 // pred_region
      %44 = dma.done [#allocation5], 128
    $region17: #{tpu_custom_call.1} parent=1 // pred_fallthru
      _
    // Predicated region
    $region18: #{tpu_custom_call.1} parent=1 // pred_check
      _
    $region19: #{tpu_custom_call.1} parent=1 // pred_check_branch
      %46 = sbr.rel (0) target = $region21
    $region20: #{tpu_custom_call.1} parent=1 // pred_region
      %47 = dma.done [#allocation7], 128
    $region21: #{tpu_custom_call.1} parent=1 // pred_fallthru
      _
    // Predicated region
    $region22: #{tpu_custom_call.1} parent=1 // pred_check
      _
    $region23: #{tpu_custom_call.1} parent=1 // pred_check_branch
      %49 = sbr.rel (0) target = $region25
    $region24: #{tpu_custom_call.1} parent=1 // pred_region
      %50 = dma.done [#allocation7], 256
    $region25: #{tpu_custom_call.1} parent=1 // pred_fallthru
      _
    %p51 = scmp.eq.s32.totalorder 0, 0
    // Predicated region
    $region26: #{tpu_custom_call.1} parent=1 // pred_check
      %p52 = pneg %p51
    $region27: #{tpu_custom_call.1} parent=1 // pred_check_branch
      %54 = sbr.rel (%p52) target = $region29
    $region28: #{tpu_custom_call.1} parent=1 // pred_region
      %vm55 = vcmask 7168
      %56 = vst.msk [vmem:[#allocation2] sm:$0xff] %vm55, -1e+30
      %57 = vst.msk [vmem:[#allocation3] sm:$0xff] %vm55, 0.0
    $region29: #{tpu_custom_call.1} parent=1 // pred_fallthru
      _
    %v58 = vld [vmem:[#allocation4] sm:$0xff]
    %v59 = vld [vmem:[#allocation8] sm:$0xff]
    %v60 = vld [vmem:[#allocation8 + $0x8] sm:$0xff]
    %vm61 = vcmask 261120
    %v63 = vsel %vm61, %v58, 0
    %v66 = vsel %vm61, %v59, 0
    %v69 = vsel %vm61, %v60, 0
    %71 = vmatprep.subr.mxu0 0.0
    %72 = vmatpush1.xpose.msra.mxu0 0.0
    %73 = vmatprep.subr.mxu0 0.0
    %74 = vmatpush1.xpose.msra.mxu0 0.0
    %75 = vmatprep.subr.mxu0 0.0
    %76 = vmatpush1.xpose.msra.mxu0 0.0
    %77 = vmatprep.subr.mxu0 0.0
    %78 = vmatpush1.xpose.msra.mxu0 0.0
    %79 = vmatprep.subr.mxu0 0.0
    %80 = vmatpush1.xpose.msra.mxu0 0.0
    %81 = vmatprep.subr.mxu0 0.0
    %82 = vmatpush1.xpose.msra.mxu0 0.0
    %83 = vmatprep.subr.mxu0 0.0
    %84 = vmatpush1.xpose.msra.mxu0 0.0
    %85 = vmatprep.subr.mxu0 0.0
    %86 = vmatpush1.xpose.msra.mxu0 0.0
    %87 = vmatprep.subr.mxu0 0.0
    %88 = vmatpush1.xpose.msra.mxu0 0.0
    %89 = vmatprep.subr.mxu0 0.0
    %90 = vmatpush1.xpose.msra.mxu0 0.0
    %91 = vmatprep.subr.mxu0 0.0
    %92 = vmatpush1.xpose.msra.mxu0 0.0
    %93 = vmatprep.subr.mxu0 0.0
    %94 = vmatpush1.xpose.msra.mxu0 0.0
    %95 = vmatprep.subr.mxu0 0.0
    %96 = vmatpush1.xpose.msra.mxu0 0.0
    %97 = vmatprep.subr.mxu0 0.0
    %98 = vmatpush1.xpose.msra.mxu0 0.0
    %99 = vmatprep.subr.mxu0 0.0
    %100 = vmatpush1.xpose.msra.mxu0 %v69
    %101 = vmatprep.subr.mxu0 0.0
    %102 = vmatpush1.xpose.msra.mxu0 %v66
    %103 = vmatprep.subr.mxu0 0.0
    %104 = vmatpush2.xpose.msra.mxu0 0.0
    %105 = vmatprep.subr.mxu0 0.0
    %106 = vmatpush2.xpose.msra.mxu0 0.0
    %107 = vmatprep.subr.mxu0 0.0
    %108 = vmatpush2.xpose.msra.mxu0 0.0
    %109 = vmatprep.subr.mxu0 0.0
    %110 = vmatpush2.xpose.msra.mxu0 0.0
    %111 = vmatprep.subr.mxu0 0.0
    %112 = vmatpush2.xpose.msra.mxu0 0.0
    %113 = vmatprep.subr.mxu0 0.0
    %114 = vmatpush2.xpose.msra.mxu0 0.0
    %115 = vmatprep.subr.mxu0 0.0
    %116 = vmatpush2.xpose.msra.mxu0 0.0
    %117 = vmatprep.subr.mxu0 0.0
    %118 = vmatpush2.xpose.msra.mxu0 0.0
    %119 = vmatprep.subr.mxu0 0.0
    %120 = vmatpush2.xpose.msra.mxu0 0.0
    %121 = vmatprep.subr.mxu0 0.0
    %122 = vmatpush2.xpose.msra.mxu0 0.0
    %123 = vmatprep.subr.mxu0 0.0
    %124 = vmatpush2.xpose.msra.mxu0 0.0
    %125 = vmatprep.subr.mxu0 0.0
    %126 = vmatpush2.xpose.msra.mxu0 0.0
    %127 = vmatprep.subr.mxu0 0.0
    %128 = vmatpush2.xpose.msra.mxu0 0.0
    %129 = vmatprep.subr.mxu0 0.0
    %130 = vmatpush2.xpose.msra.mxu0 0.0
    %131 = vmatprep.subr.mxu0 0.0
    %132 = vmatpush2.xpose.msra.mxu0 0.0
    %133 = vmatprep.subr.mxu0 0.0
    %134 = vmatpush2.xpose.msra.mxu0 0.0
    %135 = vmatprep.mubr.f32.mxu0 0.0
    %136 = vmatmul.mubr.f32.gmra.mxu0 %v63
    %v137 = vpop.f32.mrf.mxu0
    %v138 = vadd.f32 0.0, %v137
    %v139 = vpop.f32.mrf.mxu0
    %140 = vdwg.mxu0
    %s141 = smul.u32 0, 8
    %v142 = vlaneseq
    %v143 = vshrl.u32 %v142, 7
    %v144 = vstv %s141
    %v145 = vadd.s32 %v144, %v143
    %s146 = smul.u32 0, 16
    %v147 = vlaneseq
    %v148 = vand.u32 %v147, 127
    %v149 = vstv %s146
    %v150 = vadd.s32 %v149, %v148
    %vm151 = vcmp.ge.s32.totalorder %v150, 8
    %v152 = vadd.s32 %v145, 8
    %vm153 = vcmp.eq.s32.totalorder %v150, %v152
    %vm154 = vmand %vm151, %vm153
    %vm155 = vcmp.ge.s32.totalorder %v150, 16
    %vm156 = vmor %vm154, %vm155
    %v157 = vsel %vm156, -inf, %v138
    %v158 = vld [vmem:[#allocation2] sm:$0xff]
    %vm159 = vcmask 130048
    %v160 = vsel %vm159, %v157, -inf
    %161 = vmax.xlane.f32.xlu0 %v160
    %v162 = vpop.xlane.xlu0 %161
    %v163 = vmax.f32 %v158, %v162
    %v164 = vsub.f32 %v158, %v163
    %v165 = vmul.f32 %v164, 1.442695
    %v166 = vpow.pop %v165
    %v167 = vld [vmem:[#allocation3] sm:$0xff]
    %v168 = vmul.f32 %v166, %v167
    %170 = vset.pattern.permute.xlu0 0
    %171 = vperm.xlu0 %170, %v163
    %v172 = vpop.permute.xlu0 %171
    %v174 = vsub.f32 %v157, %v172
    %v175 = vmul.f32 %v174, 1.442695
    %v176 = vpow.pop %v175
    %v177 = vsel %vm159, %v176, 0.0
    %178 = vadd.xlane.f32.xlu0 %v177
    %v179 = vpop.xlane.xlu0 %178
    %v180 = vadd.f32 %v168, %v179
    %vm181 = vcmask 7168
    %182 = vst.msk [vmem:[#allocation3] sm:$0xff] %vm181, %v180
    %183 = vst.msk [vmem:[#allocation2] sm:$0xff] %vm181, %v163
    // Predicated region
    $region30: #{tpu_custom_call.1} parent=1 // pred_check
      %p184 = pneg %p51
    $region31: #{tpu_custom_call.1} parent=1 // pred_check_branch
      %186 = sbr.rel (%p184) target = $region33
    $region32: #{tpu_custom_call.1} parent=1 // pred_region
      %v187 = vld [vmem:[#allocation6] sm:$0xff]
      %v188 = vmul.f32 %v58, %v187
      %v189 = vsel %vm61, %v188, 0.0
      %190 = vadd.xlane.f32.xlu0 %v189
      %v191 = vpop.xlane.xlu0 %190
      %v192 = vld [vmem:[#allocation2] sm:$0xff]
      %v193 = vld [vmem:[#allocation3] sm:$0xff]
      %v194 = vlog2.pop %v193
      %v195 = vmul.f32 %v194, 0.6931472
      %v196 = vadd.f32 %v192, %v195
      %v197 = vsub.f32 %v196, %v191
      %198 = vst.msk [vmem:[%s3] sm:$0xff] %vm181, %v197
    $region33: #{tpu_custom_call.1} parent=1 // pred_fallthru
      _
    // Predicated region
    $region34: #{tpu_custom_call.1} parent=1 // pred_check
      _
    $region35: #{tpu_custom_call.1} parent=1 // pred_check_branch
      %200 = sbr.rel (0) target = $region37
    $region36: #{tpu_custom_call.1} parent=1 // pred_region
      _
    $region37: #{tpu_custom_call.1} parent=1 // pred_fallthru
      _
    // Predicated region
    $region38: #{tpu_custom_call.1} parent=1 // pred_check
      _
    $region39: #{tpu_custom_call.1} parent=1 // pred_check_branch
      %202 = sbr.rel (0) target = $region41
    $region40: #{tpu_custom_call.1} parent=1 // pred_region
      _
    $region41: #{tpu_custom_call.1} parent=1 // pred_fallthru
      _
    %203 = vsyncpa [#allocation5], 1
    %204 = vsyncpa [#allocation7], 1

</llo_original>
